<compile_context>
chip_gen: v6e
topology: v6e:2x2x1
jax: 0.10.0
libtpu: 0.0.40
codegen_flags: <defaults>
</compile_context>

<pallas_src>
import functools
import math

import jax
import jax.numpy as jnp
from jax.experimental import pallas as pl
from jax.experimental.pallas import tpu as pltpu


def _layernorm_kernel(x_ref, g_ref, b_ref, o_ref, *, eps):
    # x_ref: (tile_rows, H); g_ref/b_ref: (1, H), already f32.
    # All arithmetic in f32 (upcast-compute-downcast).
    x = x_ref[...].astype(jnp.float32)
    mean = jnp.mean(x, axis=-1, keepdims=True)
    # One-pass variance: E[x^2] - mean^2 (clamped >= 0 against cancellation).
    # Avoids keeping a full-tile `centered` f32 slab live across the reduction.
    mean_sq = jnp.mean(x * x, axis=-1, keepdims=True)
    var = jnp.maximum(mean_sq - mean * mean, 0.0)
    inv_std = jax.lax.rsqrt(var + eps)
    # Single fused expression -> minimal live f32 temporaries in VMEM.
    o_ref[...] = ((x - mean) * inv_std * g_ref[...] + b_ref[...]).astype(o_ref.dtype)


def _vmem_capacity_bytes():
    # Physical VMEM per TensorCore. Fall back to the smallest current value
    # (64 MiB, v7x) if the query is unavailable -- conservative everywhere.
    try:
        return int(pltpu.get_tpu_info().vmem_capacity_bytes)
    except Exception:
        return 64 << 20


def _bytes_per_tile_row(H, itemsize):
    # Double-buffered input + output tiles in x.dtype, plus the f32
    # intermediates actually live in the fused body: one slab for f32 inputs
    # (the upcast is a no-op), two for sub-f32 inputs (upcast copy + temp).
    f32_slabs = 1 if itemsize >= 4 else 2
    return H * (2 * 2 * itemsize + f32_slabs * 4)


def _choose_tile_rows(rows, H, itemsize, vmem_tile_budget, min_steps):
    # Sublane packing: 8 rows per native tile for f32, 16 for bf16, 32 for int8.
    row_align = max(8, 32 // max(itemsize, 1))
    t = vmem_tile_budget // max(_bytes_per_tile_row(H, itemsize), 1)
    # Keep >= min_steps grid steps where possible: 4 on 2-TensorCore chips
    # (v7x, so the "parallel" row axis shards across both cores), 2 on
    # single-TC chips (just enough to keep the DMA pipeline busy).
    if rows >= min_steps * row_align:
        t = min(t, -(-rows // min_steps))
    if t >= rows:
        # Single block covering the whole row axis (block == full dim is a
        # legal block shape even when rows is not a multiple of 8).
        return rows, row_align
    t = max(row_align, (int(t) // row_align) * row_align)
    return t, row_align


def layer_normalisation(x, gamma, beta, *, eps=1e-5, tile_rows=None):
    """Forward of LayerNormalisation: normalise over the trailing
    len(gamma.shape) dims, then out = gamma * y + beta. Same shape/dtype as x."""
    n_norm = gamma.ndim
    norm_shape = x.shape[x.ndim - n_norm:]
    assert tuple(gamma.shape) == tuple(norm_shape) == tuple(beta.shape)
    H = math.prod(norm_shape)
    rows = math.prod(x.shape[: x.ndim - n_norm])

    itemsize = jnp.dtype(x.dtype).itemsize
    vmem_cap = _vmem_capacity_bytes()
    # ~45% of physical VMEM as per-tile working-set budget.
    vmem_tile_budget = int(vmem_cap * 0.45)
    # 2-TC chips (v7x) are the only current generation with 64 MiB VMEM.
    min_steps = 4 if vmem_cap <= (64 << 20) else 2

    if tile_rows is None:
        tile_rows, _ = _choose_tile_rows(rows, H, itemsize, vmem_tile_budget, min_steps)
    else:
        row_align = max(8, 32 // max(itemsize, 1))
        assert tile_rows == rows or tile_rows % row_align == 0, (
            "tile_rows must equal rows or align to the packed sublane tile")

    x2d = x.reshape(rows, H)
    # Cast gamma/beta to f32 once here (not per grid step inside the body).
    g2d = gamma.reshape(1, H).astype(jnp.float32)
    b2d = beta.reshape(1, H).astype(jnp.float32)

    grid = (pl.cdiv(rows, tile_rows),)

    # Explicit VMEM limit: working set + headroom, clamped to <= 75% of
    # physical (48 MiB on v7x, 96 MiB on v5e/v6e). The default scoped limit is
    # only 16 MiB on v5e / 32 MiB on v6e & v7x.
    tile_bytes = tile_rows * _bytes_per_tile_row(H, itemsize) + 2 * H * 4
    vmem_limit = int(min(max(tile_bytes + (8 << 20), 32 << 20), (vmem_cap * 3) // 4))

    kernel = functools.partial(_layernorm_kernel, eps=eps)

    out2d = pl.pallas_call(
        kernel,
        out_shape=jax.ShapeDtypeStruct((rows, H), x.dtype),
        grid_spec=pltpu.PrefetchScalarGridSpec(
            num_scalar_prefetch=0,
            grid=grid,
            in_specs=[
                pl.BlockSpec((tile_rows, H), lambda i: (i, 0)),
                # Constant block index -> gamma/beta stay resident, no per-step DMA.
                pl.BlockSpec((1, H), lambda i: (0, 0)),
                pl.BlockSpec((1, H), lambda i: (0, 0)),
            ],
            out_specs=pl.BlockSpec((tile_rows, H), lambda i: (i, 0)),
        ),
        compiler_params=pltpu.CompilerParams(
            dimension_semantics=("parallel",),
            vmem_limit_bytes=vmem_limit,
        ),
        cost_estimate=pl.CostEstimate(
            flops=int(8 * rows * H),
            transcendentals=int(rows),
            bytes_accessed=int(2 * rows * H * itemsize + 2 * H * 4),
        ),
    )(x2d, g2d, b2d)

    return out2d.reshape(x.shape)


def _reference(x, gamma, beta, eps=1e-5):
    # Pure-JAX mirror of the PyTorch forward (dims = trailing len(gamma.shape) dims).
    dims = tuple(range(x.ndim - gamma.ndim, x.ndim))
    mean = jnp.mean(x, axis=dims, keepdims=True)
    var = jnp.mean((x - mean) ** 2, axis=dims, keepdims=True)
    std = jnp.sqrt(var + eps)
    y = (x - mean) / std
    return gamma * y + beta


if __name__ == "__main__":
    key = jax.random.PRNGKey(0)

    # Small shape consistent with the module: batch=2, seq=8, hidden=32.
    B, S, H = 2, 8, 32
    x = jax.random.normal(key, (B, S, H), dtype=jnp.float32)

    # Module __init__: gamma=ones, beta=zeros over parameters_shape=[hidden].
    gamma = jnp.ones((H,), dtype=jnp.float32)
    beta = jnp.zeros((H,), dtype=jnp.float32)

    out = layer_normalisation(x, gamma, beta, eps=1e-5)
    out = jax.block_until_ready(out)

    ref = _reference(x, gamma, beta, eps=1e-5)
    assert out.shape == x.shape and out.dtype == x.dtype
    assert jnp.allclose(out, ref, atol=1e-5, rtol=1e-5), "mismatch vs reference"

    # Ragged rows (rows = 15) with a forced 8-row tile: exercises the
    # non-divisible grid / masked partial last block path (no pad, no slice).
    x2 = jax.random.normal(jax.random.PRNGKey(1), (3, 5, H), dtype=jnp.float32)
    out2 = jax.block_until_ready(
        layer_normalisation(x2, gamma, beta, eps=1e-5, tile_rows=8))
    ref2 = _reference(x2, gamma, beta, eps=1e-5)
    assert jnp.allclose(out2, ref2, atol=1e-5, rtol=1e-5), "mismatch (ragged rows)"

    # Lane-dense hidden (multiple of 128) through the auto-chosen tile path.
    H3 = 256
    x3 = jax.random.normal(jax.random.PRNGKey(2), (2, 16, H3), dtype=jnp.float32)
    g3 = jnp.ones((H3,), dtype=jnp.float32)
    b3 = jnp.zeros((H3,), dtype=jnp.float32)
    out3 = jax.block_until_ready(layer_normalisation(x3, g3, b3, eps=1e-5))
    ref3 = _reference(x3, g3, b3, eps=1e-5)
    assert jnp.allclose(out3, ref3, atol=1e-5, rtol=1e-5), "mismatch (lane-dense)"

    print("KERNEL_OK")
</pallas_src>

<mosaic_0001>
module attributes {stable_mosaic.version = 11 : i64} {
  func.func @_layernorm_kernel(%arg0: i32, %arg1: memref<16x32xf32, #tpu.memory_space<vmem>>, %arg2: memref<1x32xf32, #tpu.memory_space<vmem>>, %arg3: memref<1x32xf32, #tpu.memory_space<vmem>>, %arg4: memref<16x32xf32, #tpu.memory_space<vmem>>) attributes {dimension_semantics = [#tpu.dimension_semantics<parallel>], iteration_bounds = array<i64: 1>, scalar_prefetch = 0 : i64, scratch_operands = 0 : i64, tpu.core_type = #tpu.core_type<tc>, window_params = [{transform_indices = @transform_0, window_bounds = array<i64: 16, 32>}, {pipeline_mode = #tpu.pipeline_mode<synchronous>, transform_indices = @transform_1, window_bounds = array<i64: 1, 32>}, {pipeline_mode = #tpu.pipeline_mode<synchronous>, transform_indices = @transform_2, window_bounds = array<i64: 1, 32>}, {transform_indices = @transform_3, window_bounds = array<i64: 16, 32>}]} {
    %c0 = arith.constant 0 : index
    %c0_0 = arith.constant 0 : index
    %0 = vector.load %arg1[%c0, %c0_0] : memref<16x32xf32, #tpu.memory_space<vmem>>, vector<16x32xf32>
    %cst = arith.constant dense<0.000000e+00> : vector<16xf32>
    %1 = vector.multi_reduction <add>, %0, %cst [1] : vector<16x32xf32> to vector<16xf32>
    %2 = vector.shape_cast %1 : vector<16xf32> to vector<16x1xf32>
    %cst_1 = arith.constant 3.200000e+01 : f32
    %3 = vector.broadcast %cst_1 : f32 to vector<16x1xf32>
    %4 = arith.divf %2, %3 : vector<16x1xf32>
    %5 = arith.mulf %0, %0 : vector<16x32xf32>
    %cst_2 = arith.constant dense<0.000000e+00> : vector<16xf32>
    %6 = vector.multi_reduction <add>, %5, %cst_2 [1] : vector<16x32xf32> to vector<16xf32>
    %7 = vector.shape_cast %6 : vector<16xf32> to vector<16x1xf32>
    %cst_3 = arith.constant 3.200000e+01 : f32
    %8 = vector.broadcast %cst_3 : f32 to vector<16x1xf32>
    %9 = arith.divf %7, %8 : vector<16x1xf32>
    %10 = arith.mulf %4, %4 : vector<16x1xf32>
    %11 = arith.subf %9, %10 : vector<16x1xf32>
    %cst_4 = arith.constant 0.000000e+00 : f32
    %12 = vector.broadcast %cst_4 : f32 to vector<16x1xf32>
    %13 = arith.maximumf %11, %12 : vector<16x1xf32>
    %cst_5 = arith.constant 9.99999974E-6 : f32
    %14 = vector.broadcast %cst_5 : f32 to vector<16x1xf32>
    %15 = arith.addf %13, %14 : vector<16x1xf32>
    %16 = math.rsqrt %15 : vector<16x1xf32>
    %17 = vector.broadcast %4 : vector<16x1xf32> to vector<16x32xf32>
    %18 = arith.subf %0, %17 : vector<16x32xf32>
    %19 = vector.broadcast %16 : vector<16x1xf32> to vector<16x32xf32>
    %20 = arith.mulf %18, %19 : vector<16x32xf32>
    %c0_6 = arith.constant 0 : index
    %c0_7 = arith.constant 0 : index
    %21 = vector.load %arg2[%c0_6, %c0_7] : memref<1x32xf32, #tpu.memory_space<vmem>>, vector<1x32xf32>
    %22 = vector.broadcast %21 : vector<1x32xf32> to vector<16x32xf32>
    %23 = arith.mulf %20, %22 : vector<16x32xf32>
    %c0_8 = arith.constant 0 : index
    %c0_9 = arith.constant 0 : index
    %24 = vector.load %arg3[%c0_8, %c0_9] : memref<1x32xf32, #tpu.memory_space<vmem>>, vector<1x32xf32>
    %25 = vector.broadcast %24 : vector<1x32xf32> to vector<16x32xf32>
    %26 = arith.addf %23, %25 : vector<16x32xf32>
    %c0_10 = arith.constant 0 : index
    %c0_11 = arith.constant 0 : index
    %27 = vector.load %arg4[%c0_10, %c0_11] : memref<16x32xf32, #tpu.memory_space<vmem>>, vector<16x32xf32>
    tpu.vector_store %arg4[%c0_10, %c0_11], %26 {strides = array<i32>} : memref<16x32xf32, #tpu.memory_space<vmem>>, vector<16x32xf32>,
    return
  }
  func.func @transform_0(%arg0: i32) -> (i32, i32) {
    %c0_i32 = arith.constant 0 : i32
    %c0_i32_0 = arith.constant 0 : i32
    return %arg0, %c0_i32 : i32, i32
  }
  func.func @transform_1(%arg0: i32) -> (i32, i32) {
    %c0_i32 = arith.constant 0 : i32
    %c0_i32_0 = arith.constant 0 : i32
    %c0_i32_1 = arith.constant 0 : i32
    return %c0_i32, %c0_i32_0 : i32, i32
  }
  func.func @transform_2(%arg0: i32) -> (i32, i32) {
    %c0_i32 = arith.constant 0 : i32
    %c0_i32_0 = arith.constant 0 : i32
    %c0_i32_1 = arith.constant 0 : i32
    return %c0_i32, %c0_i32_0 : i32, i32
  }
  func.func @transform_3(%arg0: i32) -> (i32, i32) {
    %c0_i32 = arith.constant 0 : i32
    %c0_i32_0 = arith.constant 0 : i32
    return %arg0, %c0_i32 : i32, i32
  }
}

</mosaic_0001>

<llo_original>
// kernel: tpu_custom_call.1
$region0: #{tpu_custom_call.1}
  #allocation0 [shape = 'u32[]', space=smem, size = 0x4, offset = 0x4, fixed_abs, tag = 'smem constant byte address 0x4 - core index']
  #allocation1 [shape = 'u32[144,128]{1,0:T(1,128)}', space=vmem, size = 0x12000, scoped, tag = 'internal scratch']
  %s0 = inlined_call_operand.hbm [shape: f32[16,32], index: 0, kind: input, shape index: {}]
  %s1 = inlined_call_operand.vmem [shape: f32[1,32], index: 1, kind: input, shape index: {}]
  %s2 = inlined_call_operand.vmem [shape: f32[1,32], index: 2, kind: input, shape index: {}]
  %s3 = inlined_call_operand.hbm [shape: f32[16,32], index: 3, kind: output, shape index: {}]
  %s4 = sld [smem:[#allocation0]]
  $region26: #{tpu_custom_call.1} parent=0
    _
  %s6 = ssub.s32 1, %s4
  %s7 = scalar_select 0, %s6, %s4
  $region1: #{tpu_custom_call.1} parent=0
    #allocation2 [shape = 'u8[8192]{0}', space=vmem, size = 0x2000, scoped, tag = 'input window, operand 0, single buffered']
    #allocation3 [shape = 's32[1]{0}', space=sflag, size = 0x4, scoped, tag = 'scoped memory for tpu_custom_call.1']
    #allocation4 [shape = 's32[1]{0}', space=sflag, size = 0x4, scoped, tag = 'scoped memory for tpu_custom_call.1']
    #allocation5 [shape = 'u8[8192]{0}', space=vmem, size = 0x2000, scoped, tag = 'output window, operand 0, single buffered']
    %8 = vsyncpa [#allocation3], 0
    %9 = vsyncpa [#allocation4], 0
    // Predicated region
    $region2: #{tpu_custom_call.1} parent=1 // pred_check
      _
    $region3: #{tpu_custom_call.1} parent=1 // pred_check_branch
      %11 = sbr.rel (0) target = $region5
    $region4: #{tpu_custom_call.1} parent=1 // pred_region
      %s13 = ssub.s32 256, 256
      %14 = vsyncadd [#allocation3], %s13
      %s15 = sshll.u32 [#allocation2], 4
      %s16 = int_to_ptr.vmem [resolvable:$true] %s15
      %21 = dma.hbm_to_vmem [thread:$0]  %s0, 256, %s16, [#allocation3], 128, 128, 8
    $region5: #{tpu_custom_call.1} parent=1 // pred_fallthru
      _
    // Predicated region
    $region6: #{tpu_custom_call.1} parent=1 // pred_check
      _
    $region7: #{tpu_custom_call.1} parent=1 // pred_check_branch
      %23 = sbr.rel (0) target = $region9
    $region8: #{tpu_custom_call.1} parent=1 // pred_region
      _
    $region9: #{tpu_custom_call.1} parent=1 // pred_fallthru
      _
    // Predicated region
    $region10: #{tpu_custom_call.1} parent=1 // pred_check
      _
    $region11: #{tpu_custom_call.1} parent=1 // pred_check_branch
      %25 = sbr.rel (0) target = $region13
    $region12: #{tpu_custom_call.1} parent=1 // pred_region
      _
    $region13: #{tpu_custom_call.1} parent=1 // pred_fallthru
      _
    // Predicated region
    $region14: #{tpu_custom_call.1} parent=1 // pred_check
      _
    $region15: #{tpu_custom_call.1} parent=1 // pred_check_branch
      %27 = sbr.rel (0) target = $region17
    $region16: #{tpu_custom_call.1} parent=1 // pred_region
      %28 = dma.done [#allocation3], 256
    $region17: #{tpu_custom_call.1} parent=1 // pred_fallthru
      _
    %v29 = vld [vmem:[#allocation2] sm:$0xff]
    %v30 = vld [vmem:[#allocation2 + $0x8] sm:$0xff]
    %vm31 = vcmask 261120
    %v32 = vsel %vm31, %v29, 0.0
    %33 = vadd.xlane.f32.xlu0 %v32
    %v34 = vpop.xlane.xlu0 %33
    %v35 = vsel %vm31, %v30, 0.0
    %36 = vadd.xlane.f32.xlu0 %v35
    %v37 = vpop.xlane.xlu0 %36
    %v38 = vrcp.pop 32.0
    %v39 = vmul.f32 %v34, %v38
    %v40 = vmul.f32 %v37, %v38
    %v41 = vmul.f32 %v29, %v29
    %v42 = vmul.f32 %v30, %v30
    %v43 = vsel %vm31, %v41, 0.0
    %44 = vadd.xlane.f32.xlu0 %v43
    %v45 = vpop.xlane.xlu0 %44
    %v46 = vsel %vm31, %v42, 0.0
    %47 = vadd.xlane.f32.xlu0 %v46
    %v48 = vpop.xlane.xlu0 %47
    %v49 = vmul.f32 %v45, %v38
    %v50 = vmul.f32 %v48, %v38
    %v51 = vmul.f32 %v39, %v39
    %v52 = vmul.f32 %v40, %v40
    %v53 = vsub.f32 %v49, %v51
    %v54 = vsub.f32 %v50, %v52
    %v55 = vmax.f32 %v53, 0.0
    %v56 = vmax.f32 %v54, 0.0
    %v57 = vadd.f32 %v55, 1e-05
    %v58 = vadd.f32 %v56, 1e-05
    %v59 = vrsqrt.pop %v57
    %v60 = vrsqrt.pop %v58
    %v61 = vsub.f32 %v29, %v39
    %v62 = vsub.f32 %v30, %v40
    %v63 = vmul.f32 %v61, %v59
    %v64 = vmul.f32 %v62, %v60
    %v65 = vld [vmem:[%s1] sm:$0x1]
    %v67 = vlaneseq
    %v68 = vshrl.u32 %v67, 7
    %v69 = vsub.s32 0, %v68
    %v70 = vrot.slane %v65, %v69
    %v72 = vmul.f32 %v63, %v70
    %v73 = vmul.f32 %v64, %v70
    %v74 = vld [vmem:[%s2] sm:$0x1]
    %v76 = vlaneseq
    %v77 = vshrl.u32 %v76, 7
    %v78 = vsub.s32 0, %v77
    %v79 = vrot.slane %v74, %v78
    %v81 = vadd.f32 %v72, %v79
    %v82 = vadd.f32 %v73, %v79
    %83 = vst.msk [vmem:[#allocation5] sm:$0xff] %vm31, %v81
    %84 = vst.msk [vmem:[#allocation5 + $0x8] sm:$0xff] %vm31, %v82
    // Predicated region
    $region18: #{tpu_custom_call.1} parent=1 // pred_check
      _
    $region19: #{tpu_custom_call.1} parent=1 // pred_check_branch
      %86 = sbr.rel (0) target = $region21
    $region20: #{tpu_custom_call.1} parent=1 // pred_region
      %s88 = ssub.s32 256, 256
      %89 = vsyncadd [#allocation4], %s88
      %s90 = sshll.u32 [#allocation5], 4
      %s91 = int_to_ptr.vmem [resolvable:$true] %s90
      %96 = dma.vmem_to_hbm [thread:$0]  %s91, 256, %s3, [#allocation4], 128, 128, 8
    $region21: #{tpu_custom_call.1} parent=1 // pred_fallthru
      _
    // Predicated region
    $region22: #{tpu_custom_call.1} parent=1 // pred_check
      _
    $region23: #{tpu_custom_call.1} parent=1 // pred_check_branch
      %98 = sbr.rel (0) target = $region25
    $region24: #{tpu_custom_call.1} parent=1 // pred_region
      %99 = dma.done [#allocation4], 256
    $region25: #{tpu_custom_call.1} parent=1 // pred_fallthru
      _
    %100 = vsyncpa [#allocation3], 1
    %101 = vsyncpa [#allocation4], 1

</llo_original>
